<compile_context>
chip_gen: v6e
topology: v6e:2x2x1
jax: 0.10.0
libtpu: 0.0.40
codegen_flags: <defaults>
</compile_context>

<pallas_src>
import math
from typing import NamedTuple, Optional

import jax
import jax.numpy as jnp
from jax import lax
from jax.experimental import pallas as pl
from jax.experimental.pallas import tpu as pltpu


# --------------------------------------------------------------------------- table construction
def make_fixed_embedding_table(input_dim: int, embed_dim: int, dtype=jnp.float32) -> jnp.ndarray:
    """Replicates FixedEmbedding.__init__ weights (sin on even cols, cos on odd cols)."""
    position = jnp.arange(0, input_dim, dtype=jnp.float32)[:, None]                 # (V, 1)
    div_term = jnp.exp(
        jnp.arange(0, embed_dim, 2, dtype=jnp.float32) * -(math.log(10000.0) / embed_dim)
    )                                                                                # (ceil(E/2),)
    angles = position * div_term                                                     # (V, ceil(E/2))
    w = jnp.zeros((input_dim, embed_dim), dtype=jnp.float32)
    w = w.at[:, 0::2].set(jnp.sin(angles)[:, : (embed_dim + 1) // 2])
    w = w.at[:, 1::2].set(jnp.cos(angles)[:, : embed_dim // 2])
    return w.astype(dtype)


class FixedEmbeddingParams(NamedTuple):
    table: jnp.ndarray   # (V, E) original table (used by the DMA-gather path)
    w_exp: jnp.ndarray   # (pack*V, pack*E) block-diagonal expanded table (MXU path)
    pack: int


def _lane_pack(embed: int) -> int:
    return 128 // embed if (embed < 128 and 128 % embed == 0) else 1


def prepare_fixed_embedding(table: jnp.ndarray, mxu_dtype=None) -> FixedEmbeddingParams:
    """Precompute (once) the expanded table for the MXU path.

    Call this once at setup and pass the result to `fixed_embedding_forward` so the
    block-diagonal expansion (and optional bf16 cast) is not rebuilt on every forward.
    With mxu_dtype=jnp.bfloat16 the matmul path runs at native bf16 MXU rate; the one-hot
    selection is exact so outputs are exactly the bf16-rounded table rows.
    """
    vocab, embed = table.shape
    pack = _lane_pack(embed)
    wdt = jnp.dtype(mxu_dtype) if mxu_dtype is not None else table.dtype
    w = table.astype(wdt)
    if pack == 1:
        w_exp = w
    else:
        # Block-diagonal expansion: W_exp[p*V + v, p*E:(p+1)*E] = W[v].
        w_exp = jnp.kron(jnp.eye(pack, dtype=wdt), w)
    return FixedEmbeddingParams(table=table, w_exp=w_exp, pack=pack)


def fixed_embedding_positions(table: jnp.ndarray, seq_len: int, batch_shape=()) -> jnp.ndarray:
    """Fast path for the common x == arange(seq_len) case: a pure table slice (no kernel)."""
    emb = lax.dynamic_slice_in_dim(table, 0, seq_len, axis=0)
    return jnp.broadcast_to(emb, (*batch_shape, seq_len, table.shape[1]))


# --------------------------------------------------------------------------- per-generation VMEM
def _vmem_budget() -> tuple[int, int]:
    """(block budget bytes, requested scoped-VMEM limit) sized per TPU generation."""
    try:
        cap = int(pltpu.get_tpu_info().vmem_capacity_bytes)
    except Exception:
        cap = 64 << 20                      # conservative (v7x has 64 MiB / TensorCore)
    limit = min(cap // 2, 64 << 20)         # 32 MiB on v7x, 64 MiB on v5e/v6e (128 MiB physical)
    return (limit * 3) // 4, limit


# --------------------------------------------------------------------------- MXU (one-hot) path
def _onehot_matmul_kernel(idx_ref, w_ref, out_ref):
    # idx_ref: (rows_blk, pack) int32 ids (token t = row r, slot p -> flat r*pack + p)
    # w_ref:   (pack*V, pack*E) block-diagonal expanded table, VMEM resident
    # out_ref: (rows_blk, pack*E) -> row r holds its `pack` embeddings concatenated on lanes
    idx = idx_ref[...]
    rows, pack = idx.shape
    vocab = w_ref.shape[0] // pack

    # One compare per one-hot element: per-band (rows, V) iota, concatenated along lanes.
    # Out-of-range / negative ids match nothing -> all-zero output row.
    col = lax.broadcasted_iota(jnp.int32, (rows, vocab), 1)
    if pack == 1:
        onehot = (col == idx).astype(w_ref.dtype)
    else:
        parts = [(col == idx[:, p:p + 1]).astype(w_ref.dtype) for p in range(pack)]
        onehot = jnp.concatenate(parts, axis=-1)                    # (rows, pack*V)

    out_ref[...] = jnp.dot(
        onehot, w_ref[...], preferred_element_type=jnp.float32
    ).astype(out_ref.dtype)


# --------------------------------------------------------------------------- HBM DMA-gather path
_GATHER_WINDOW = 64   # outstanding row DMAs; one shared semaphore, no extra buffers


def _make_dma_gather_kernel(window: int, vocab: int):
    def kernel(idx_ref, table_ref, out_ref, sem):
        # idx_ref:   (n_pad,) int32 in SMEM (scalar-prefetched)
        # table_ref: (V, E) in HBM (memory_space=pl.ANY)
        # out_ref:   (blk, E) VMEM output block; rows are DMA'd straight from the HBM table
        blk = out_ref.shape[0]
        base = pl.program_id(0) * blk

        def copy(dst_row, src_row):
            return pltpu.make_async_copy(table_ref.at[src_row], out_ref.at[dst_row], sem)

        def start(t):
            # Read the id and issue the DMA before any wait (keeps SMEM sst->sld forwarding).
            src = jnp.clip(idx_ref[base + t], 0, vocab - 1)   # guard OOB ids (PyTorch errors)
            copy(t, src).start()

        # Prologue: fill the window with outstanding copies.
        lax.fori_loop(0, window, lambda t, c: (start(t), c)[1], 0, unroll=True)

        # Steady state: issue row t, then retire row t - window.  All copies are equal-sized
        # and share one semaphore, so the wait only needs size accounting (rows are never
        # read in-kernel; out-of-order completion is harmless).
        def steady(t, c):
            start(t)
            copy(t - window, 0).wait()
            return c
        lax.fori_loop(window, blk, steady, 0, unroll=8)

        # Drain the remaining in-flight copies.
        lax.fori_loop(blk - window, blk, lambda t, c: (copy(t, 0).wait(), c)[1], 0, unroll=True)

    return kernel


# --------------------------------------------------------------------------- wrapper
def fixed_embedding_forward(x: jnp.ndarray,
                            table_or_params,
                            *,
                            block_tokens: int = 2048,
                            matmul_table_bytes_limit: int = 4 << 20,
                            matmul_vocab_limit: int = 4096,
                            mxu_dtype=None) -> jnp.ndarray:
    """x: integer ids, any shape. Returns x.shape + (embed_dim,) in table.dtype."""
    if isinstance(table_or_params, FixedEmbeddingParams):
        params: Optional[FixedEmbeddingParams] = table_or_params
        table = params.table
    else:
        params = None
        table = table_or_params

    vocab, embed = table.shape
    out_dtype = table.dtype
    out_isz = jnp.dtype(out_dtype).itemsize
    orig_shape = x.shape
    idx_flat = x.reshape(-1).astype(jnp.int32)
    n = idx_flat.shape[0]

    pack = _lane_pack(embed)
    mxu_dt = (params.w_exp.dtype if params is not None
              else (jnp.dtype(mxu_dtype) if mxu_dtype is not None else out_dtype))
    mxu_isz = jnp.dtype(mxu_dt).itemsize
    w_exp_bytes = pack * vocab * pack * embed * mxu_isz

    # Compute-aware crossover: one-hot work is O(V) per token, so large-vocab tables go to
    # the DMA path even if the expanded table would fit VMEM.
    use_matmul = (w_exp_bytes <= matmul_table_bytes_limit) and (vocab <= matmul_vocab_limit)

    vmem_budget, vmem_limit = _vmem_budget()

    if use_matmul:
        # ---- packed one-hot @ expanded table on the MXU, lane-dense output ----
        if params is None:
            params = prepare_fixed_embedding(table, mxu_dtype=mxu_dtype)
        w_exp = params.w_exp

        tok_align = pack * 8
        # Per-token VMEM: idx + out blocks (double-buffered) + one-hot / iota / compare temps.
        per_tok = 2 * 4 + 2 * embed * out_isz + vocab * (mxu_isz + 8)
        budget = max(vmem_budget - 2 * w_exp_bytes, per_tok * tok_align)  # 2x: w_exp is buffered
        max_tok = max(budget // per_tok, tok_align)
        blk = min(block_tokens, max_tok, pl.cdiv(n, tok_align) * tok_align)
        blk = max(tok_align, (blk // tok_align) * tok_align)
        n_pad = pl.cdiv(n, blk) * blk
        rows_blk = blk // pack

        idx_padded = jnp.pad(idx_flat, (0, n_pad - n)).reshape(n_pad // pack, pack)

        cost = pl.CostEstimate(
            flops=int(2 * n_pad * pack * vocab * embed),
            transcendentals=0,
            bytes_accessed=int(n_pad * 4 + w_exp_bytes + n_pad * embed * out_isz))

        out = pl.pallas_call(
            _onehot_matmul_kernel,
            out_shape=jax.ShapeDtypeStruct((n_pad // pack, pack * embed), out_dtype),
            grid_spec=pltpu.PrefetchScalarGridSpec(
                num_scalar_prefetch=0,
                grid=(n_pad // blk,),
                in_specs=[
                    pl.BlockSpec((rows_blk, pack), lambda i: (i, 0)),
                    pl.BlockSpec((pack * vocab, pack * embed), lambda i: (0, 0)),
                ],
                out_specs=pl.BlockSpec((rows_blk, pack * embed), lambda i: (i, 0)),
            ),
            compiler_params=pltpu.CompilerParams(
                dimension_semantics=("parallel",),      # shards across v7x's two TensorCores
                vmem_limit_bytes=vmem_limit),
            cost_estimate=cost,
        )(idx_padded, w_exp)
        out = out.reshape(n_pad, embed)[:n]
    else:
        # ---- HBM-resident table, manual per-row DMA gather ----
        tok_align = 8
        per_tok = 2 * 4 + 2 * embed * out_isz           # idx + double-buffered output rows
        max_tok = max(vmem_budget // per_tok, tok_align)
        blk = min(block_tokens, max_tok, pl.cdiv(n, tok_align) * tok_align)
        blk = max(tok_align, (blk // tok_align) * tok_align)
        n_pad = pl.cdiv(n, blk) * blk
        window = min(_GATHER_WINDOW, blk)

        # TODO(synk): switch the id array to a blocked SMEM input spec (removes the
        # next_pow2(4*n_pad) SMEM residency cap for very large token counts) and lane-pack /
        # pad the output last dim when embed < 128 to make HBM writeback lane-dense.
        idx_padded = jnp.pad(idx_flat, (0, n_pad - n))

        cost = pl.CostEstimate(
            flops=0, transcendentals=0,
            bytes_accessed=int(n_pad * 4 + 2 * n_pad * embed * out_isz))

        out = pl.pallas_call(
            _make_dma_gather_kernel(window, vocab),
            out_shape=jax.ShapeDtypeStruct((n_pad, embed), out_dtype),
            grid_spec=pltpu.PrefetchScalarGridSpec(
                num_scalar_prefetch=1,
                grid=(n_pad // blk,),
                in_specs=[pl.BlockSpec(memory_space=pl.ANY)],         # table stays in HBM
                out_specs=pl.BlockSpec((blk, embed), lambda i, idx: (i, 0)),
                scratch_shapes=[pltpu.SemaphoreType.DMA(())],
            ),
            compiler_params=pltpu.CompilerParams(
                dimension_semantics=("parallel",),
                vmem_limit_bytes=vmem_limit),
            cost_estimate=cost,
        )(idx_padded, table)
        out = out[:n]

    return out.reshape(*orig_shape, embed)


if __name__ == "__main__":
    # Small shapes consistent with the module: input_dim = 16, embed_dim = 32, x = (2, 8).
    input_dim, embed_dim = 16, 32
    batch, seq = 2, 8

    table = make_fixed_embedding_table(input_dim, embed_dim)

    key = jax.random.PRNGKey(0)
    x = jax.random.randint(key, (batch, seq), 0, input_dim, dtype=jnp.int32)

    ref = jnp.take(table, x, axis=0)          # nn.Embedding lookup semantics

    # Path 1: small table -> packed one-hot @ table MXU kernel (auto-selected, exact f32).
    out = fixed_embedding_forward(x, table)
    out = jax.block_until_ready(out)
    assert out.shape == (batch, seq, embed_dim), out.shape
    assert out.dtype == jnp.float32
    assert jnp.allclose(out, ref, atol=1e-6), "matmul-path mismatch vs reference gather"

    # Path 1b: precomputed params + bf16 MXU variant (native-rate MXU; bf16-rounded rows).
    params_bf16 = prepare_fixed_embedding(table, mxu_dtype=jnp.bfloat16)
    out_bf = fixed_embedding_forward(x, params_bf16)
    out_bf = jax.block_until_ready(out_bf)
    assert out_bf.shape == (batch, seq, embed_dim)
    assert jnp.allclose(out_bf, ref, atol=2e-2), "bf16 matmul-path mismatch vs reference"

    # Path 2: force the HBM DMA-gather path (used automatically for large tables / vocabs).
    out_g = fixed_embedding_forward(x, table, matmul_table_bytes_limit=0)
    out_g = jax.block_until_ready(out_g)
    assert jnp.allclose(out_g, ref, atol=1e-6), "gather-path mismatch vs reference gather"

    # Contiguous-position fast path (common positional-encoding use): pure table slice.
    pos_ref = jnp.broadcast_to(table[:seq], (batch, seq, embed_dim))
    out_pos = fixed_embedding_positions(table, seq, (batch,))
    assert jnp.allclose(out_pos, pos_ref), "positions fast-path mismatch"

    print("KERNEL_OK")
</pallas_src>

<mosaic_0001>
module attributes {stable_mosaic.version = 11 : i64} {
  func.func @_onehot_matmul_kernel(%arg0: i32, %arg1: memref<8x4xi32, #tpu.memory_space<vmem>>, %arg2: memref<64x128xf32, #tpu.memory_space<vmem>>, %arg3: memref<8x128xf32, #tpu.memory_space<vmem>>) attributes {dimension_semantics = [#tpu.dimension_semantics<parallel>], iteration_bounds = array<i64: 1>, scalar_prefetch = 0 : i64, scratch_operands = 0 : i64, tpu.core_type = #tpu.core_type<tc>, window_params = [{transform_indices = @transform_0, window_bounds = array<i64: 8, 4>}, {pipeline_mode = #tpu.pipeline_mode<synchronous>, transform_indices = @transform_1, window_bounds = array<i64: 64, 128>}, {transform_indices = @transform_2, window_bounds = array<i64: 8, 128>}]} {
    %c0 = arith.constant 0 : index
    %c0_0 = arith.constant 0 : index
    %0 = vector.load %arg1[%c0, %c0_0] : memref<8x4xi32, #tpu.memory_space<vmem>>, vector<8x4xi32>
    %1 = tpu.iota {dimensions = array<i32: 1>} : vector<8x16xi32>
    %2 = vector.extract_strided_slice %0 {offsets = [0, 0], sizes = [8, 1], strides = [1, 1]} : vector<8x4xi32> to vector<8x1xi32>
    %3 = vector.broadcast %2 : vector<8x1xi32> to vector<8x16xi32>
    %4 = arith.cmpi eq, %1, %3 : vector<8x16xi32>
    %5 = arith.extui %4 : vector<8x16xi1> to vector<8x16xi32>
    %6 = arith.sitofp %5 : vector<8x16xi32> to vector<8x16xf32>
    %7 = vector.extract_strided_slice %0 {offsets = [0, 1], sizes = [8, 1], strides = [1, 1]} : vector<8x4xi32> to vector<8x1xi32>
    %8 = vector.broadcast %7 : vector<8x1xi32> to vector<8x16xi32>
    %9 = arith.cmpi eq, %1, %8 : vector<8x16xi32>
    %10 = arith.extui %9 : vector<8x16xi1> to vector<8x16xi32>
    %11 = arith.sitofp %10 : vector<8x16xi32> to vector<8x16xf32>
    %12 = vector.extract_strided_slice %0 {offsets = [0, 2], sizes = [8, 1], strides = [1, 1]} : vector<8x4xi32> to vector<8x1xi32>
    %13 = vector.broadcast %12 : vector<8x1xi32> to vector<8x16xi32>
    %14 = arith.cmpi eq, %1, %13 : vector<8x16xi32>
    %15 = arith.extui %14 : vector<8x16xi1> to vector<8x16xi32>
    %16 = arith.sitofp %15 : vector<8x16xi32> to vector<8x16xf32>
    %17 = vector.extract_strided_slice %0 {offsets = [0, 3], sizes = [8, 1], strides = [1, 1]} : vector<8x4xi32> to vector<8x1xi32>
    %18 = vector.broadcast %17 : vector<8x1xi32> to vector<8x16xi32>
    %19 = arith.cmpi eq, %1, %18 : vector<8x16xi32>
    %20 = arith.extui %19 : vector<8x16xi1> to vector<8x16xi32>
    %21 = arith.sitofp %20 : vector<8x16xi32> to vector<8x16xf32>
    %22 = tpu.concatenate %6, %11, %16, %21 in 1 : vector<8x16xf32>, vector<8x16xf32>, vector<8x16xf32>, vector<8x16xf32> -> vector<8x64xf32>
    %c0_1 = arith.constant 0 : index
    %c0_2 = arith.constant 0 : index
    %23 = vector.load %arg2[%c0_1, %c0_2] : memref<64x128xf32, #tpu.memory_space<vmem>>, vector<64x128xf32>
    %cst = arith.constant dense<0.000000e+00> : vector<8x128xf32>
    %24 = tpu.matmul %22, %23, %cst {dimension_numbers = #tpu.dot_dimension_numbers<[1], [0], [0], [1], [0, 0, 1, 1], [], []>} : vector<8x64xf32>, vector<64x128xf32>, vector<8x128xf32> -> vector<8x128xf32>
    %c0_3 = arith.constant 0 : index
    %c0_4 = arith.constant 0 : index
    %25 = vector.load %arg3[%c0_3, %c0_4] : memref<8x128xf32, #tpu.memory_space<vmem>>, vector<8x128xf32>
    tpu.vector_store %arg3[%c0_3, %c0_4], %24 {strides = array<i32>} : memref<8x128xf32, #tpu.memory_space<vmem>>, vector<8x128xf32>,
    return
  }
  func.func @transform_0(%arg0: i32) -> (i32, i32) {
    %c0_i32 = arith.constant 0 : i32
    %c0_i32_0 = arith.constant 0 : i32
    return %arg0, %c0_i32 : i32, i32
  }
  func.func @transform_1(%arg0: i32) -> (i32, i32) {
    %c0_i32 = arith.constant 0 : i32
    %c0_i32_0 = arith.constant 0 : i32
    %c0_i32_1 = arith.constant 0 : i32
    return %c0_i32, %c0_i32_0 : i32, i32
  }
  func.func @transform_2(%arg0: i32) -> (i32, i32) {
    %c0_i32 = arith.constant 0 : i32
    %c0_i32_0 = arith.constant 0 : i32
    return %arg0, %c0_i32 : i32, i32
  }
}

</mosaic_0001>

<llo_original>
// kernel: tpu_custom_call.1
$region0: #{tpu_custom_call.1}
  #allocation0 [shape = 'u32[]', space=smem, size = 0x4, offset = 0x4, fixed_abs, tag = 'smem constant byte address 0x4 - core index']
  #allocation1 [shape = 'u32[144,128]{1,0:T(1,128)}', space=vmem, size = 0x12000, scoped, tag = 'internal scratch']
  %s0 = inlined_call_operand.vmem [shape: s32[8,4], index: 0, kind: input, shape index: {}]
  %s1 = inlined_call_operand.hbm [shape: f32[64,128], index: 1, kind: input, shape index: {}]
  %s2 = inlined_call_operand.hbm [shape: f32[8,128], index: 2, kind: output, shape index: {}]
  %s3 = sld [smem:[#allocation0]]
  $region22: #{tpu_custom_call.1} parent=0
    _
  %s5 = ssub.s32 1, %s3
  %s6 = scalar_select 0, %s5, %s3
  $region1: #{tpu_custom_call.1} parent=0
    #allocation2 [shape = 'u8[32768]{0}', space=vmem, size = 0x8000, scoped, tag = 'input window, operand 1, single buffered']
    #allocation3 [shape = 's32[1]{0}', space=sflag, size = 0x4, scoped, tag = 'scoped memory for tpu_custom_call.1']
    #allocation4 [shape = 's32[1]{0}', space=sflag, size = 0x4, scoped, tag = 'scoped memory for tpu_custom_call.1']
    #allocation5 [shape = 'u8[4096]{0}', space=vmem, size = 0x1000, scoped, tag = 'output window, operand 0, single buffered']
    %7 = vsyncpa [#allocation3], 0
    %8 = vsyncpa [#allocation4], 0
    // Predicated region
    $region2: #{tpu_custom_call.1} parent=1 // pred_check
      _
    $region3: #{tpu_custom_call.1} parent=1 // pred_check_branch
      %10 = sbr.rel (0) target = $region5
    $region4: #{tpu_custom_call.1} parent=1 // pred_region
      _
    $region5: #{tpu_custom_call.1} parent=1 // pred_fallthru
      _
    // Predicated region
    $region6: #{tpu_custom_call.1} parent=1 // pred_check
      _
    $region7: #{tpu_custom_call.1} parent=1 // pred_check_branch
      %12 = sbr.rel (0) target = $region9
    $region8: #{tpu_custom_call.1} parent=1 // pred_region
      %s14 = ssub.s32 1024, 1024
      %15 = vsyncadd [#allocation3], %s14
      %s16 = sshll.u32 [#allocation2], 4
      %s17 = int_to_ptr.vmem [resolvable:$true] %s16
      %22 = dma.hbm_to_vmem [thread:$0]  %s1, 1024, %s17, [#allocation3], 128, 128, 8
    $region9: #{tpu_custom_call.1} parent=1 // pred_fallthru
      _
    // Predicated region
    $region10: #{tpu_custom_call.1} parent=1 // pred_check
      _
    $region11: #{tpu_custom_call.1} parent=1 // pred_check_branch
      %24 = sbr.rel (0) target = $region13
    $region12: #{tpu_custom_call.1} parent=1 // pred_region
      %25 = dma.done [#allocation3], 1024
    $region13: #{tpu_custom_call.1} parent=1 // pred_fallthru
      _
    %v26 = vld [vmem:[%s0] sm:$0xff]
    %v27 = vlaneseq
    %v28 = vand.u32 %v27, 127
    %29 = vset.pattern.permute.xlu0 0
    %30 = vperm.xlu0 %29, %v26
    %v31 = vpop.permute.xlu0 %30
    %vm32 = vcmp.eq.s32.totalorder %v28, %v31
    %v33 = vsel %vm32, 1, 0
    %v34 = vcvt.s32.f32 %v33
    %35 = vset.pattern.permute.xlu0 1
    %36 = vperm.xlu0 %35, %v26
    %v37 = vpop.permute.xlu0 %36
    %vm38 = vcmp.eq.s32.totalorder %v28, %v37
    %v39 = vsel %vm38, 1, 0
    %v40 = vcvt.s32.f32 %v39
    %41 = vset.pattern.permute.xlu0 2
    %42 = vperm.xlu0 %41, %v26
    %v43 = vpop.permute.xlu0 %42
    %vm44 = vcmp.eq.s32.totalorder %v28, %v43
    %v45 = vsel %vm44, 1, 0
    %v46 = vcvt.s32.f32 %v45
    %47 = vset.pattern.permute.xlu0 3
    %48 = vperm.xlu0 %47, %v26
    %v49 = vpop.permute.xlu0 %48
    %vm50 = vcmp.eq.s32.totalorder %v28, %v49
    %v51 = vsel %vm50, 1, 0
    %v52 = vcvt.s32.f32 %v51
    %54 = vrot.lane.b32.xlu0 %v40, 16
    %v55 = vpop.permute.xlu0 %54
    %58 = vrot.lane.b32.xlu0 %v46, 32
    %v59 = vpop.permute.xlu0 %58
    %62 = vrot.lane.b32.xlu0 %v52, 48
    %v63 = vpop.permute.xlu0 %62
    %vm65 = vcmask 130048
    %v66 = vsel %vm65, %v34, %v55
    %vm67 = vcmask 261120
    %v68 = vsel %vm67, %v66, %v59
    %vm69 = vcmask 392192
    %v70 = vsel %vm69, %v68, %v63
    %v71 = vld [vmem:[#allocation2] sm:$0xff]
    %v72 = vld [vmem:[#allocation2 + $0x8] sm:$0xff]
    %v73 = vld [vmem:[#allocation2 + $0x10] sm:$0xff]
    %v74 = vld [vmem:[#allocation2 + $0x18] sm:$0xff]
    %v75 = vld [vmem:[#allocation2 + $0x20] sm:$0xff]
    %v76 = vld [vmem:[#allocation2 + $0x28] sm:$0xff]
    %v77 = vld [vmem:[#allocation2 + $0x30] sm:$0xff]
    %v78 = vld [vmem:[#allocation2 + $0x38] sm:$0xff]
    %vm79 = vcmask 523264
    %v81 = vsel %vm79, %v70, 0
    %83 = vmatprep.subr.mxu0 0.0
    %84 = vmatpush1.msra.mxu0 0.0
    %85 = vmatprep.subr.mxu0 0.0
    %86 = vmatpush1.msra.mxu0 0.0
    %87 = vmatprep.subr.mxu0 0.0
    %88 = vmatpush1.msra.mxu0 0.0
    %89 = vmatprep.subr.mxu0 0.0
    %90 = vmatpush1.msra.mxu0 0.0
    %91 = vmatprep.subr.mxu0 0.0
    %92 = vmatpush1.msra.mxu0 0.0
    %93 = vmatprep.subr.mxu0 0.0
    %94 = vmatpush1.msra.mxu0 0.0
    %95 = vmatprep.subr.mxu0 0.0
    %96 = vmatpush1.msra.mxu0 0.0
    %97 = vmatprep.subr.mxu0 0.0
    %98 = vmatpush1.msra.mxu0 0.0
    %99 = vmatprep.subr.mxu0 0.0
    %100 = vmatpush1.msra.mxu0 %v78
    %101 = vmatprep.subr.mxu0 0.0
    %102 = vmatpush1.msra.mxu0 %v77
    %103 = vmatprep.subr.mxu0 0.0
    %104 = vmatpush1.msra.mxu0 %v76
    %105 = vmatprep.subr.mxu0 0.0
    %106 = vmatpush1.msra.mxu0 %v75
    %107 = vmatprep.subr.mxu0 0.0
    %108 = vmatpush1.msra.mxu0 %v74
    %109 = vmatprep.subr.mxu0 0.0
    %110 = vmatpush1.msra.mxu0 %v73
    %111 = vmatprep.subr.mxu0 0.0
    %112 = vmatpush1.msra.mxu0 %v72
    %113 = vmatprep.subr.mxu0 0.0
    %114 = vmatpush1.msra.mxu0 %v71
    %115 = vmatprep.subr.mxu0 0.0
    %116 = vmatpush2.msra.mxu0 0.0
    %117 = vmatprep.subr.mxu0 0.0
    %118 = vmatpush2.msra.mxu0 0.0
    %119 = vmatprep.subr.mxu0 0.0
    %120 = vmatpush2.msra.mxu0 0.0
    %121 = vmatprep.subr.mxu0 0.0
    %122 = vmatpush2.msra.mxu0 0.0
    %123 = vmatprep.subr.mxu0 0.0
    %124 = vmatpush2.msra.mxu0 0.0
    %125 = vmatprep.subr.mxu0 0.0
    %126 = vmatpush2.msra.mxu0 0.0
    %127 = vmatprep.subr.mxu0 0.0
    %128 = vmatpush2.msra.mxu0 0.0
    %129 = vmatprep.subr.mxu0 0.0
    %130 = vmatpush2.msra.mxu0 0.0
    %131 = vmatprep.subr.mxu0 0.0
    %132 = vmatpush2.msra.mxu0 0.0
    %133 = vmatprep.subr.mxu0 0.0
    %134 = vmatpush2.msra.mxu0 0.0
    %135 = vmatprep.subr.mxu0 0.0
    %136 = vmatpush2.msra.mxu0 0.0
    %137 = vmatprep.subr.mxu0 0.0
    %138 = vmatpush2.msra.mxu0 0.0
    %139 = vmatprep.subr.mxu0 0.0
    %140 = vmatpush2.msra.mxu0 0.0
    %141 = vmatprep.subr.mxu0 0.0
    %142 = vmatpush2.msra.mxu0 0.0
    %143 = vmatprep.subr.mxu0 0.0
    %144 = vmatpush2.msra.mxu0 0.0
    %145 = vmatprep.subr.mxu0 0.0
    %146 = vmatpush2.msra.mxu0 0.0
    %147 = vmatprep.mubr.f32.mxu0 0.0
    %148 = vmatmul.mubr.f32.gmra.mxu0 %v81
    %v149 = vpop.f32.mrf.mxu0
    %v150 = vadd.f32 0.0, %v149
    %v151 = vpop.f32.mrf.mxu0
    %152 = vdwg.mxu0
    %153 = vst [vmem:[#allocation5] sm:$0xff] %v150
    // Predicated region
    $region14: #{tpu_custom_call.1} parent=1 // pred_check
      _
    $region15: #{tpu_custom_call.1} parent=1 // pred_check_branch
      %155 = sbr.rel (0) target = $region17
    $region16: #{tpu_custom_call.1} parent=1 // pred_region
      %s157 = ssub.s32 128, 128
      %158 = vsyncadd [#allocation4], %s157
      %s160 = sshll.u32 [#allocation5], 4
      %s161 = int_to_ptr.vmem [resolvable:$true] %s160
      %163 = dma.vmem_to_hbm [thread:$0]  %s161, 128, %s2, [#allocation4]
    $region17: #{tpu_custom_call.1} parent=1 // pred_fallthru
      _
    // Predicated region
    $region18: #{tpu_custom_call.1} parent=1 // pred_check
      _
    $region19: #{tpu_custom_call.1} parent=1 // pred_check_branch
      %165 = sbr.rel (0) target = $region21
    $region20: #{tpu_custom_call.1} parent=1 // pred_region
      %166 = dma.done [#allocation4], 128
    $region21: #{tpu_custom_call.1} parent=1 // pred_fallthru
      _
    %167 = vsyncpa [#allocation3], 1
    %168 = vsyncpa [#allocation4], 1

</llo_original>
